<compile_context>
chip_gen: v7x
topology: tpu7x:2x2x1
jax: 0.10.0
libtpu: 0.0.40
codegen_flags: <defaults>
</compile_context>

<pallas_src>
import numpy as np
import jax
import jax.numpy as jnp
from jax.experimental import pallas as pl
from jax.experimental.pallas import tpu as pltpu

L_IN = 205                          # x.view(1, 1, 205)
K = 7                               # conv kernel size
STRIDE = 3
C1 = 16                             # conv1 out channels
L1 = (L_IN - K) // STRIDE + 1       # 67
C2 = 32                             # conv2 out channels
L2 = (L1 - K) // STRIDE + 1         # 21
FLAT = C2 * L2                      # 672
LATENT_DIMS = 32
PATCH = STRIDE * (K - 1) + K        # 25: x-window feeding one conv2 output position
CK = K * C1                         # 112: conv2 patch rows (tap-major, then channel)

# Static im2col index matrix: X1[u, t] = x[9*t + u]   (max index 9*20+24 = 204)
_X_IDX = np.asarray(STRIDE * STRIDE * np.arange(L2)[None, :]
                    + np.arange(PATCH)[:, None], dtype=np.int32)          # (25, 21)


def _replicate_matrix():
    # R[t, t2*LATENT + j] = 1 iff t == t2        (L2, FLAT): spreads h2[c,t] across j
    col = np.arange(FLAT)[None, :]
    t = np.arange(L2)[:, None]
    return (col // LATENT_DIMS == t).astype(np.float32)


def _reduce_matrix():
    # S[t*LATENT + j, j2] = 1 iff j == j2        (FLAT, LATENT): sums over t per output j
    row = np.arange(FLAT)[:, None]
    j = np.arange(LATENT_DIMS)[None, :]
    return (row % LATENT_DIMS == j).astype(np.float32)


# ----------------------------- fused Pallas kernel ----------------------------- #

def _encoder_kernel(x1_ref, w1p_ref, b1p_ref, w2a_ref, b2_ref,
                    wcat_ref, rmat_ref, smat_ref, bfc_ref, o_ref):
    # conv1 + ReLU, evaluated directly in conv2-patch layout:
    #   h1[k*C1+c1, t] = relu(conv1(x)[c1, 3t+k])
    h1 = jnp.dot(w1p_ref[...], x1_ref[...],
                 preferred_element_type=jnp.float32)                      # (112, 21)
    h1 = jnp.maximum(h1 + b1p_ref[...], 0.0)

    # conv2 + ReLU: one matmul over the (tap, channel) patch axis
    h2 = jnp.dot(w2a_ref[...], h1.astype(jnp.bfloat16),
                 preferred_element_type=jnp.float32)                      # (32, 21)
    h2 = jnp.maximum(h2 + b2_ref[...], 0.0)

    # fc1 without an in-kernel flatten:
    #   h2rep[c, t*LATENT+j] = h2[c, t]
    h2rep = jnp.dot(h2.astype(jnp.bfloat16), rmat_ref[...],
                    preferred_element_type=jnp.float32)                   # (32, 672)
    p = h2rep * wcat_ref[...].astype(jnp.float32)                         # (32, 672)
    colsum = jnp.sum(p, axis=0, keepdims=True)                            # (1, 672)
    out = jnp.dot(colsum.astype(jnp.bfloat16), smat_ref[...],
                  preferred_element_type=jnp.float32)                     # (1, 32)
    o_ref[...] = out + bfc_ref[...]


# --------------------------------- wrappers ------------------------------------ #

def prepare_params(params):
    """One-time repacking of the PyTorch-layout weights into kernel operands."""
    w1, b1, w2, b2, wfc, bfc = params
    w1_2d = w1.reshape(C1, K).astype(jnp.float32)          # in_channels == 1

    # W1p[k*C1 + c1, 3k + k'] = w1[c1, k']   (zero elsewhere)
    W1p = jnp.zeros((K, C1, PATCH), jnp.float32)
    for k in range(K):
        W1p = W1p.at[k, :, STRIDE * k:STRIDE * k + K].set(w1_2d)
    W1p = W1p.reshape(CK, PATCH)

    b1p = jnp.tile(b1.reshape(1, C1), (K, 1)).reshape(CK, 1)              # b1p[k*C1+c1]=b1[c1]
    W2a = jnp.transpose(w2, (0, 2, 1)).reshape(C2, CK)                    # [c2, k*C1+c1]
    # Wcat[c, t*LATENT + j] = wfc[j, c*L2 + t]
    Wcat = jnp.transpose(wfc.reshape(LATENT_DIMS, C2, L2), (1, 2, 0)).reshape(C2, FLAT)

    return dict(
        w1p=W1p.astype(jnp.bfloat16),
        b1p=b1p.astype(jnp.float32),
        w2a=W2a.astype(jnp.bfloat16),
        b2=b2.reshape(C2, 1).astype(jnp.float32),
        wcat=Wcat.astype(jnp.bfloat16),
        rmat=jnp.asarray(_replicate_matrix(), jnp.bfloat16),
        smat=jnp.asarray(_reduce_matrix(), jnp.bfloat16),
        bfc=bfc.reshape(1, LATENT_DIMS).astype(jnp.float32),
    )


@jax.jit
def encoder_forward(x, prepped):
    """x: any array with 205 elements (matches x.view(1, 1, 205))."""
    xf = x.reshape(-1).astype(jnp.float32)
    x1 = xf[_X_IDX].astype(jnp.bfloat16)                                  # (25, 21) im2col

    vmem = pl.BlockSpec(memory_space=pltpu.MemorySpace.VMEM)
    return pl.pallas_call(
        _encoder_kernel,
        out_shape=jax.ShapeDtypeStruct((1, LATENT_DIMS), jnp.float32),
        in_specs=[vmem] * 9,
        out_specs=pl.BlockSpec(memory_space=pltpu.MemorySpace.VMEM),
    )(x1, prepped["w1p"], prepped["b1p"], prepped["w2a"], prepped["b2"],
      prepped["wcat"], prepped["rmat"], prepped["smat"], prepped["bfc"])


def encoder_reference(x, params):
    """Pure-JAX reference (eval-mode dropout = identity)."""
    w1, b1, w2, b2, wfc, bfc = params
    hp = jax.lax.Precision.HIGHEST
    xr = x.reshape(1, 1, L_IN)
    h1 = jax.lax.conv_general_dilated(xr, w1, (STRIDE,), 'VALID',
                                      dimension_numbers=('NCH', 'OIH', 'NCH'),
                                      precision=hp)
    h1 = jnp.maximum(h1 + b1.reshape(1, C1, 1), 0.0)
    h2 = jax.lax.conv_general_dilated(h1, w2, (STRIDE,), 'VALID',
                                      dimension_numbers=('NCH', 'OIH', 'NCH'),
                                      precision=hp)
    h2 = jnp.maximum(h2 + b2.reshape(1, C2, 1), 0.0)
    flat = h2.reshape(-1, FLAT)
    return jnp.dot(flat, wfc.T, precision=hp) + bfc


def init_params(key):
    k1, k2, k3, k4, k5, k6 = jax.random.split(key, 6)

    def u(k, shape, fan_in):
        bound = 1.0 / np.sqrt(fan_in)
        return jax.random.uniform(k, shape, jnp.float32, -bound, bound)

    w1 = u(k1, (C1, 1, K), 1 * K)
    b1 = u(k2, (C1,), 1 * K)
    w2 = u(k3, (C2, C1, K), C1 * K)
    b2 = u(k4, (C2,), C1 * K)
    wfc = u(k5, (LATENT_DIMS, FLAT), FLAT)
    bfc = u(k6, (LATENT_DIMS,), FLAT)
    return (w1, b1, w2, b2, wfc, bfc)


if __name__ == "__main__":
    key = jax.random.PRNGKey(0)
    kx, kp = jax.random.split(key)
    x = jax.random.normal(kx, (1, 1, L_IN), jnp.float32)     # matches x.view(1, 1, 205)
    params = init_params(kp)
    prepped = prepare_params(params)

    out = jax.block_until_ready(encoder_forward(x, prepped))
    assert out.shape == (1, LATENT_DIMS)

    ref = encoder_reference(x, params)
    # bf16 MXU operands with f32 accumulation -> loose-ish tolerance
    np.testing.assert_allclose(np.asarray(out), np.asarray(ref), rtol=3e-2, atol=3e-2)
    print("KERNEL_OK")
</pallas_src>

<mosaic_0001>
module attributes {stable_mosaic.version = 11 : i64} {
  func.func @_encoder_kernel(%arg0: memref<25x21xbf16, #tpu.memory_space<vmem>>, %arg1: memref<112x25xbf16, #tpu.memory_space<vmem>>, %arg2: memref<112x1xf32, #tpu.memory_space<vmem>>, %arg3: memref<32x112xbf16, #tpu.memory_space<vmem>>, %arg4: memref<32x1xf32, #tpu.memory_space<vmem>>, %arg5: memref<32x672xbf16, #tpu.memory_space<vmem>>, %arg6: memref<21x672xbf16, #tpu.memory_space<vmem>>, %arg7: memref<672x32xbf16, #tpu.memory_space<vmem>>, %arg8: memref<1x32xf32, #tpu.memory_space<vmem>>, %arg9: memref<1x32xf32, #tpu.memory_space<vmem>>) attributes {dimension_semantics = [], scalar_prefetch = 0 : i64, scratch_operands = 0 : i64, tpu.core_type = #tpu.core_type<tc>} {
    %c0 = arith.constant 0 : index
    %c0_0 = arith.constant 0 : index
    %0 = vector.load %arg1[%c0, %c0_0] : memref<112x25xbf16, #tpu.memory_space<vmem>>, vector<112x25xbf16>
    %c0_1 = arith.constant 0 : index
    %c0_2 = arith.constant 0 : index
    %1 = vector.load %arg0[%c0_1, %c0_2] : memref<25x21xbf16, #tpu.memory_space<vmem>>, vector<25x21xbf16>
    %cst = arith.constant dense<0.000000e+00> : vector<112x21xf32>
    %2 = tpu.matmul %0, %1, %cst {dimension_numbers = #tpu.dot_dimension_numbers<[1], [0], [0], [1], [0, 0, 1, 1], [], []>} : vector<112x25xbf16>, vector<25x21xbf16>, vector<112x21xf32> -> vector<112x21xf32>
    %c0_3 = arith.constant 0 : index
    %c0_4 = arith.constant 0 : index
    %3 = vector.load %arg2[%c0_3, %c0_4] : memref<112x1xf32, #tpu.memory_space<vmem>>, vector<112x1xf32>
    %4 = vector.broadcast %3 : vector<112x1xf32> to vector<112x21xf32>
    %5 = arith.addf %2, %4 : vector<112x21xf32>
    %cst_5 = arith.constant 0.000000e+00 : f32
    %6 = vector.broadcast %cst_5 : f32 to vector<112x21xf32>
    %7 = arith.maximumf %5, %6 : vector<112x21xf32>
    %c0_6 = arith.constant 0 : index
    %c0_7 = arith.constant 0 : index
    %8 = vector.load %arg3[%c0_6, %c0_7] : memref<32x112xbf16, #tpu.memory_space<vmem>>, vector<32x112xbf16>
    %9 = arith.truncf %7 : vector<112x21xf32> to vector<112x21xbf16>
    %cst_8 = arith.constant dense<0.000000e+00> : vector<32x21xf32>
    %10 = tpu.matmul %8, %9, %cst_8 {dimension_numbers = #tpu.dot_dimension_numbers<[1], [0], [0], [1], [0, 0, 1, 1], [], []>} : vector<32x112xbf16>, vector<112x21xbf16>, vector<32x21xf32> -> vector<32x21xf32>
    %c0_9 = arith.constant 0 : index
    %c0_10 = arith.constant 0 : index
    %11 = vector.load %arg4[%c0_9, %c0_10] : memref<32x1xf32, #tpu.memory_space<vmem>>, vector<32x1xf32>
    %12 = vector.broadcast %11 : vector<32x1xf32> to vector<32x21xf32>
    %13 = arith.addf %10, %12 : vector<32x21xf32>
    %cst_11 = arith.constant 0.000000e+00 : f32
    %14 = vector.broadcast %cst_11 : f32 to vector<32x21xf32>
    %15 = arith.maximumf %13, %14 : vector<32x21xf32>
    %16 = arith.truncf %15 : vector<32x21xf32> to vector<32x21xbf16>
    %c0_12 = arith.constant 0 : index
    %c0_13 = arith.constant 0 : index
    %17 = vector.load %arg6[%c0_12, %c0_13] : memref<21x672xbf16, #tpu.memory_space<vmem>>, vector<21x672xbf16>
    %cst_14 = arith.constant dense<0.000000e+00> : vector<32x672xf32>
    %18 = tpu.matmul %16, %17, %cst_14 {dimension_numbers = #tpu.dot_dimension_numbers<[1], [0], [0], [1], [0, 0, 1, 1], [], []>} : vector<32x21xbf16>, vector<21x672xbf16>, vector<32x672xf32> -> vector<32x672xf32>
    %c0_15 = arith.constant 0 : index
    %c0_16 = arith.constant 0 : index
    %19 = vector.load %arg5[%c0_15, %c0_16] : memref<32x672xbf16, #tpu.memory_space<vmem>>, vector<32x672xbf16>
    %20 = arith.extf %19 : vector<32x672xbf16> to vector<32x672xf32>
    %21 = arith.mulf %18, %20 : vector<32x672xf32>
    %cst_17 = arith.constant dense<0.000000e+00> : vector<672xf32>
    %22 = vector.multi_reduction <add>, %21, %cst_17 [0] : vector<32x672xf32> to vector<672xf32>
    %23 = vector.shape_cast %22 : vector<672xf32> to vector<1x672xf32>
    %24 = arith.truncf %23 : vector<1x672xf32> to vector<1x672xbf16>
    %c0_18 = arith.constant 0 : index
    %c0_19 = arith.constant 0 : index
    %25 = vector.load %arg7[%c0_18, %c0_19] : memref<672x32xbf16, #tpu.memory_space<vmem>>, vector<672x32xbf16>
    %cst_20 = arith.constant dense<0.000000e+00> : vector<1x32xf32>
    %26 = tpu.matmul %24, %25, %cst_20 {dimension_numbers = #tpu.dot_dimension_numbers<[1], [0], [0], [1], [0, 0, 1, 1], [], []>} : vector<1x672xbf16>, vector<672x32xbf16>, vector<1x32xf32> -> vector<1x32xf32>
    %c0_21 = arith.constant 0 : index
    %c0_22 = arith.constant 0 : index
    %27 = vector.load %arg8[%c0_21, %c0_22] : memref<1x32xf32, #tpu.memory_space<vmem>>, vector<1x32xf32>
    %28 = arith.addf %26, %27 : vector<1x32xf32>
    %c0_23 = arith.constant 0 : index
    %c0_24 = arith.constant 0 : index
    %29 = vector.load %arg9[%c0_23, %c0_24] : memref<1x32xf32, #tpu.memory_space<vmem>>, vector<1x32xf32>
    tpu.vector_store %arg9[%c0_23, %c0_24], %28 {strides = array<i32>} : memref<1x32xf32, #tpu.memory_space<vmem>>, vector<1x32xf32>,
    return
  }
}

</mosaic_0001>

<llo_original>
// kernel: encoder_forward.1
$region0: #{encoder_forward.1}
  #allocation0 [shape = 'u32[]', space=smem, size = 0x4, offset = 0x4, fixed_abs, tag = 'smem constant byte address 0x4 - core index']
  #allocation1 [shape = 'u32[144,128]{1,0:T(1,128)}', space=vmem, size = 0x12000, scoped, tag = 'internal scratch']
  %s0 = inlined_call_operand.vmem [shape: bf16[25,21], index: 0, kind: input, shape index: {}]
  %s1 = inlined_call_operand.vmem [shape: bf16[112,25], index: 1, kind: input, shape index: {}]
  %s2 = inlined_call_operand.vmem [shape: f32[112,1], index: 2, kind: input, shape index: {}]
  %s3 = inlined_call_operand.vmem [shape: bf16[32,112], index: 3, kind: input, shape index: {}]
  %s4 = inlined_call_operand.vmem [shape: f32[32,1], index: 4, kind: input, shape index: {}]
  %s5 = inlined_call_operand.vmem [shape: bf16[32,672], index: 5, kind: input, shape index: {}]
  %s6 = inlined_call_operand.vmem [shape: bf16[21,672], index: 6, kind: input, shape index: {}]
  %s7 = inlined_call_operand.vmem [shape: bf16[672,32], index: 7, kind: input, shape index: {}]
  %s8 = inlined_call_operand.vmem [shape: f32[1,32], index: 8, kind: input, shape index: {}]
  %s9 = inlined_call_operand.hbm [shape: f32[1,32], index: 9, kind: output, shape index: {}]
  %s10 = sld [smem:[#allocation0]]
  $region46: #{encoder_forward.1} parent=0
    _
  %s12 = ssub.s32 1, %s10
  %s13 = scalar_select 0, %s12, %s10
  $region1: #{encoder_forward.1} parent=0
    #allocation2 [shape = 'u8[512]{0}', space=vmem, size = 0x400, scoped, tag = 'output window, operand 0, single buffered']
    #allocation3 [shape = 's32[1]{0}', space=sflag, size = 0x4, scoped, tag = 'scoped memory for encoder_forward.1']
    %14 = vsyncpa [#allocation3], 0
    // Predicated region
    $region2: #{encoder_forward.1} parent=1 // pred_check
      _
    $region3: #{encoder_forward.1} parent=1 // pred_check_branch
      %16 = sbr.rel (0) target = $region5
    $region4: #{encoder_forward.1} parent=1 // pred_region
      _
    $region5: #{encoder_forward.1} parent=1 // pred_fallthru
      _
    // Predicated region
    $region6: #{encoder_forward.1} parent=1 // pred_check
      _
    $region7: #{encoder_forward.1} parent=1 // pred_check_branch
      %18 = sbr.rel (0) target = $region9
    $region8: #{encoder_forward.1} parent=1 // pred_region
      _
    $region9: #{encoder_forward.1} parent=1 // pred_fallthru
      _
    // Predicated region
    $region10: #{encoder_forward.1} parent=1 // pred_check
      _
    $region11: #{encoder_forward.1} parent=1 // pred_check_branch
      %20 = sbr.rel (0) target = $region13
    $region12: #{encoder_forward.1} parent=1 // pred_region
      _
    $region13: #{encoder_forward.1} parent=1 // pred_fallthru
      _
    // Predicated region
    $region14: #{encoder_forward.1} parent=1 // pred_check
      _
    $region15: #{encoder_forward.1} parent=1 // pred_check_branch
      %22 = sbr.rel (0) target = $region17
    $region16: #{encoder_forward.1} parent=1 // pred_region
      _
    $region17: #{encoder_forward.1} parent=1 // pred_fallthru
      _
    // Predicated region
    $region18: #{encoder_forward.1} parent=1 // pred_check
      _
    $region19: #{encoder_forward.1} parent=1 // pred_check_branch
      %24 = sbr.rel (0) target = $region21
    $region20: #{encoder_forward.1} parent=1 // pred_region
      _
    $region21: #{encoder_forward.1} parent=1 // pred_fallthru
      _
    // Predicated region
    $region22: #{encoder_forward.1} parent=1 // pred_check
      _
    $region23: #{encoder_forward.1} parent=1 // pred_check_branch
      %26 = sbr.rel (0) target = $region25
    $region24: #{encoder_forward.1} parent=1 // pred_region
      _
    $region25: #{encoder_forward.1} parent=1 // pred_fallthru
      _
    // Predicated region
    $region26: #{encoder_forward.1} parent=1 // pred_check
      _
    $region27: #{encoder_forward.1} parent=1 // pred_check_branch
      %28 = sbr.rel (0) target = $region29
    $region28: #{encoder_forward.1} parent=1 // pred_region
      _
    $region29: #{encoder_forward.1} parent=1 // pred_fallthru
      _
    // Predicated region
    $region30: #{encoder_forward.1} parent=1 // pred_check
      _
    $region31: #{encoder_forward.1} parent=1 // pred_check_branch
      %30 = sbr.rel (0) target = $region33
    $region32: #{encoder_forward.1} parent=1 // pred_region
      _
    $region33: #{encoder_forward.1} parent=1 // pred_fallthru
      _
    // Predicated region
    $region34: #{encoder_forward.1} parent=1 // pred_check
      _
    $region35: #{encoder_forward.1} parent=1 // pred_check_branch
      %32 = sbr.rel (0) target = $region37
    $region36: #{encoder_forward.1} parent=1 // pred_region
      _
    $region37: #{encoder_forward.1} parent=1 // pred_fallthru
      _
    %v34 = vld [vmem:[%s1] sm:$0xf]
    %v35 = vld [vmem:[%s1 + $0x4] sm:$0xf]
    %v36 = vld [vmem:[%s1 + $0x8] sm:$0xf]
    %v37 = vld [vmem:[%s1 + $0xc] sm:$0xf]
    %v38 = vld [vmem:[%s1 + $0x10] sm:$0xf]
    %v39 = vld [vmem:[%s1 + $0x14] sm:$0xf]
    %v40 = vld [vmem:[%s1 + $0x18] sm:$0xf]
    %v41 = vld [vmem:[%s1 + $0x1c] sm:$0xf]
    %v42 = vld [vmem:[%s1 + $0x20] sm:$0xf]
    %v43 = vld [vmem:[%s1 + $0x24] sm:$0xf]
    %v44 = vld [vmem:[%s1 + $0x28] sm:$0xf]
    %v45 = vld [vmem:[%s1 + $0x2c] sm:$0xf]
    %v46 = vld [vmem:[%s1 + $0x30] sm:$0xf]
    %v47 = vld [vmem:[%s1 + $0x34] sm:$0xf]
    %v48 = vld [vmem:[%s0] sm:$0xf]
    %v49 = vld [vmem:[%s0 + $0x4] sm:$0xf]
    %v50 = vld [vmem:[%s0 + $0x8] sm:$0xf]
    %v51 = vld [vmem:[%s0 + $0xc] sm:$0x1]
    %v52 = vld [vmem:[%s2] sm:$0xff]
    %v53 = vld [vmem:[%s2 + $0x8] sm:$0xff]
    %v54 = vld [vmem:[%s2 + $0x10] sm:$0xff]
    %v55 = vld [vmem:[%s2 + $0x18] sm:$0xff]
    %v56 = vld [vmem:[%s2 + $0x20] sm:$0xff]
    %v57 = vld [vmem:[%s2 + $0x28] sm:$0xff]
    %v58 = vld [vmem:[%s2 + $0x30] sm:$0xff]
    %v59 = vld [vmem:[%s2 + $0x38] sm:$0xff]
    %v60 = vld [vmem:[%s2 + $0x40] sm:$0xff]
    %v61 = vld [vmem:[%s2 + $0x48] sm:$0xff]
    %v62 = vld [vmem:[%s2 + $0x50] sm:$0xff]
    %v63 = vld [vmem:[%s2 + $0x58] sm:$0xff]
    %v64 = vld [vmem:[%s2 + $0x60] sm:$0xff]
    %v65 = vld [vmem:[%s2 + $0x68] sm:$0xff]
    %67 = vset.pattern.permute.xlu0 0
    %68 = vperm.xlu0 %67, %v52
    %v69 = vpop.permute.xlu0 %68
    %72 = vset.pattern.permute.xlu0 0
    %73 = vperm.xlu0 %72, %v53
    %v74 = vpop.permute.xlu0 %73
    %77 = vset.pattern.permute.xlu0 0
    %78 = vperm.xlu0 %77, %v54
    %v79 = vpop.permute.xlu0 %78
    %82 = vset.pattern.permute.xlu0 0
    %83 = vperm.xlu0 %82, %v55
    %v84 = vpop.permute.xlu0 %83
    %87 = vset.pattern.permute.xlu0 0
    %88 = vperm.xlu0 %87, %v56
    %v89 = vpop.permute.xlu0 %88
    %92 = vset.pattern.permute.xlu0 0
    %93 = vperm.xlu0 %92, %v57
    %v94 = vpop.permute.xlu0 %93
    %97 = vset.pattern.permute.xlu0 0
    %98 = vperm.xlu0 %97, %v58
    %v99 = vpop.permute.xlu0 %98
    %102 = vset.pattern.permute.xlu0 0
    %103 = vperm.xlu0 %102, %v59
    %v104 = vpop.permute.xlu0 %103
    %107 = vset.pattern.permute.xlu0 0
    %108 = vperm.xlu0 %107, %v60
    %v109 = vpop.permute.xlu0 %108
    %112 = vset.pattern.permute.xlu0 0
    %113 = vperm.xlu0 %112, %v61
    %v114 = vpop.permute.xlu0 %113
    %117 = vset.pattern.permute.xlu0 0
    %118 = vperm.xlu0 %117, %v62
    %v119 = vpop.permute.xlu0 %118
    %122 = vset.pattern.permute.xlu0 0
    %123 = vperm.xlu0 %122, %v63
    %v124 = vpop.permute.xlu0 %123
    %127 = vset.pattern.permute.xlu0 0
    %128 = vperm.xlu0 %127, %v64
    %v129 = vpop.permute.xlu0 %128
    %132 = vset.pattern.permute.xlu0 0
    %133 = vperm.xlu0 %132, %v65
    %v134 = vpop.permute.xlu0 %133
    %v150 = vunpack.c.l.b16 %v34
    %v151 = vunpack.c.l.b16 %v35
    %v152 = vunpack.c.l.b16 %v36
    %v153 = vunpack.c.l.b16 %v37
    %v154 = vunpack.c.l.b16 %v38
    %v155 = vunpack.c.l.b16 %v39
    %v156 = vunpack.c.l.b16 %v40
    %v157 = vunpack.c.l.b16 %v41
    %v158 = vunpack.c.l.b16 %v42
    %v159 = vunpack.c.l.b16 %v43
    %v160 = vunpack.c.l.b16 %v44
    %v161 = vunpack.c.l.b16 %v45
    %v162 = vunpack.c.l.b16 %v46
    %v163 = vunpack.c.l.b16 %v47
    %v164 = vpack.c.b16 %v151, %v150
    %v165 = vpack.c.b16 %v153, %v152
    %v166 = vpack.c.b16 %v155, %v154
    %v167 = vpack.c.b16 %v157, %v156
    %v168 = vpack.c.b16 %v159, %v158
    %v169 = vpack.c.b16 %v161, %v160
    %v170 = vpack.c.b16 %v163, %v162
    %v175 = vunpack.c.l.b16 %v48
    %v176 = vunpack.c.l.b16 %v49
    %v177 = vunpack.c.l.b16 %v50
    %v178 = vunpack.c.l.b16 %v51
    %v179 = vpack.c.b16 %v176, %v175
    %v180 = vpack.c.b16 %v178, %v177
    %vm182 = vcmask 203776
    %v184 = vsel %vm182, %v164, 0
    %v187 = vsel %vm182, %v165, 0
    %v190 = vsel %vm182, %v166, 0
    %v193 = vsel %vm182, %v167, 0
    %v196 = vsel %vm182, %v168, 0
    %v199 = vsel %vm182, %v169, 0
    %v202 = vsel %vm182, %v170, 0
    %vm204 = vcmask 1043456
    %vm205 = vcmask 1044480
    %v206 = vsel %vm204, 4294967295, 65535
    %v207 = vsel %vm205, %v206, 0
    %v209 = vand.u32 %v180, %v207
    %211 = vmatprep.subr.bf16.mxu0 0
    %212 = vmatpush1.bf16.msra.mxu0 %v179
    %213 = vmatprep.subr.bf16.mxu0 0
    %214 = vmatpush1.bf16.msra.mxu0 %v209
    %215 = vmatprep.subr.bf16.mxu0 0
    %216 = vmatpush1.bf16.msra.mxu0 0
    %217 = vmatprep.subr.bf16.mxu0 0
    %218 = vmatpush1.bf16.msra.mxu0 0
    %219 = vmatprep.subr.bf16.mxu0 0
    %220 = vmatpush1.bf16.msra.mxu0 0
    %221 = vmatprep.subr.bf16.mxu0 0
    %222 = vmatpush1.bf16.msra.mxu0 0
    %223 = vmatprep.subr.bf16.mxu0 0
    %224 = vmatpush1.bf16.msra.mxu0 0
    %225 = vmatprep.subr.bf16.mxu0 0
    %226 = vmatpush1.bf16.msra.mxu0 0
    %227 = vmatprep.subr.bf16.mxu0 0
    %228 = vmatpush1.bf16.msra.mxu0 0
    %229 = vmatprep.subr.bf16.mxu0 0
    %230 = vmatpush1.bf16.msra.mxu0 0
    %231 = vmatprep.subr.bf16.mxu0 0
    %232 = vmatpush1.bf16.msra.mxu0 0
    %233 = vmatprep.subr.bf16.mxu0 0
    %234 = vmatpush1.bf16.msra.mxu0 0
    %235 = vmatprep.subr.bf16.mxu0 0
    %236 = vmatpush1.bf16.msra.mxu0 0
    %237 = vmatprep.subr.bf16.mxu0 0
    %238 = vmatpush1.bf16.msra.mxu0 0
    %239 = vmatprep.subr.bf16.mxu0 0
    %240 = vmatpush1.bf16.msra.mxu0 0
    %241 = vmatprep.subr.bf16.mxu0 0
    %242 = vmatpush1.bf16.msra.mxu0 0
    %243 = vmatprep.mubr.bf16.mxu0 0
    %244 = vmatmul.mubr.bf16.gmra.mrb[0].mxu0 %v184
    %v245 = vpop.f32.mrb[0].mxu0
    %v246 = vadd.f32 %v69, %v245
    %v247 = vpop.f32.mrb[0].mxu0
    %v248 = vpop.f32.mrb[0].mxu0
    %v249 = vadd.f32 %v74, %v248
    %v250 = vpop.f32.mrb[0].mxu0
    %251 = vmatprep.mubr.bf16.mxu0 0
    %252 = vmatmul.mubr.bf16.gmra.mrb[0].mxu0 %v187
    %v253 = vpop.f32.mrb[0].mxu0
    %v254 = vadd.f32 %v79, %v253
    %v255 = vpop.f32.mrb[0].mxu0
    %v256 = vpop.f32.mrb[0].mxu0
    %v257 = vadd.f32 %v84, %v256
    %v258 = vpop.f32.mrb[0].mxu0
    %259 = vmatprep.mubr.bf16.mxu0 0
    %260 = vmatmul.mubr.bf16.gmra.mrb[0].mxu0 %v190
    %v261 = vpop.f32.mrb[0].mxu0
    %v262 = vadd.f32 %v89, %v261
    %v263 = vpop.f32.mrb[0].mxu0
    %v264 = vpop.f32.mrb[0].mxu0
    %v265 = vadd.f32 %v94, %v264
    %v266 = vpop.f32.mrb[0].mxu0
    %267 = vmatprep.mubr.bf16.mxu0 0
    %268 = vmatmul.mubr.bf16.gmra.mrb[0].mxu0 %v193
    %v269 = vpop.f32.mrb[0].mxu0
    %v270 = vadd.f32 %v99, %v269
    %v271 = vpop.f32.mrb[0].mxu0
    %v272 = vpop.f32.mrb[0].mxu0
    %v273 = vadd.f32 %v104, %v272
    %v274 = vpop.f32.mrb[0].mxu0
    %275 = vmatprep.mubr.bf16.mxu0 0
    %276 = vmatmul.mubr.bf16.gmra.mrb[0].mxu0 %v196
    %v277 = vpop.f32.mrb[0].mxu0
    %v278 = vadd.f32 %v109, %v277
    %v279 = vpop.f32.mrb[0].mxu0
    %v280 = vpop.f32.mrb[0].mxu0
    %v281 = vadd.f32 %v114, %v280
    %v282 = vpop.f32.mrb[0].mxu0
    %283 = vmatprep.mubr.bf16.mxu0 0
    %284 = vmatmul.mubr.bf16.gmra.mrb[0].mxu0 %v199
    %v285 = vpop.f32.mrb[0].mxu0
    %v286 = vadd.f32 %v119, %v285
    %v287 = vpop.f32.mrb[0].mxu0
    %v288 = vpop.f32.mrb[0].mxu0
    %v289 = vadd.f32 %v124, %v288
    %v290 = vpop.f32.mrb[0].mxu0
    %291 = vmatprep.mubr.bf16.mxu0 0
    %292 = vmatmul.mubr.bf16.gmra.mrb[0].mxu0 %v202
    %v293 = vpop.f32.mrb[0].mxu0
    %v294 = vadd.f32 %v129, %v293
    %v295 = vpop.f32.mrb[0].mxu0
    %v296 = vpop.f32.mrb[0].mxu0
    %v297 = vadd.f32 %v134, %v296
    %v298 = vpop.f32.mrb[0].mxu0
    %299 = vdwg.mxu0
    %v300 = vmax.f32 %v246, 0.0
    %v301 = vmax.f32 %v249, 0.0
    %v302 = vmax.f32 %v254, 0.0
    %v303 = vmax.f32 %v257, 0.0
    %v304 = vmax.f32 %v262, 0.0
    %v305 = vmax.f32 %v265, 0.0
    %v306 = vmax.f32 %v270, 0.0
    %v307 = vmax.f32 %v273, 0.0
    %v308 = vmax.f32 %v278, 0.0
    %v309 = vmax.f32 %v281, 0.0
    %v310 = vmax.f32 %v286, 0.0
    %v311 = vmax.f32 %v289, 0.0
    %v312 = vmax.f32 %v294, 0.0
    %v313 = vmax.f32 %v297, 0.0
    %v314 = vld [vmem:[%s3] sm:$0xf]
    %v315 = vld [vmem:[%s3 + $0x4] sm:$0xf]
    %v316 = vld [vmem:[%s3 + $0x8] sm:$0xf]
    %v317 = vld [vmem:[%s3 + $0xc] sm:$0xf]
    %v318 = vpack.c.bf16 %v301, %v300
    %v319 = vpack.c.bf16 %v303, %v302
    %v320 = vpack.c.bf16 %v305, %v304
    %v321 = vpack.c.bf16 %v307, %v306
    %v322 = vpack.c.bf16 %v309, %v308
    %v323 = vpack.c.bf16 %v311, %v310
    %v324 = vpack.c.bf16 %v313, %v312
    %v325 = vld [vmem:[%s4] sm:$0xff]
    %v326 = vld [vmem:[%s4 + $0x8] sm:$0xff]
    %v327 = vld [vmem:[%s4 + $0x10] sm:$0xff]
    %v328 = vld [vmem:[%s4 + $0x18] sm:$0xff]
    %330 = vset.pattern.permute.xlu0 0
    %331 = vperm.xlu0 %330, %v325
    %v332 = vpop.permute.xlu0 %331
    %335 = vset.pattern.permute.xlu0 0
    %336 = vperm.xlu0 %335, %v326
    %v337 = vpop.permute.xlu0 %336
    %340 = vset.pattern.permute.xlu0 0
    %341 = vperm.xlu0 %340, %v327
    %v342 = vpop.permute.xlu0 %341
    %345 = vset.pattern.permute.xlu0 0
    %346 = vperm.xlu0 %345, %v328
    %v347 = vpop.permute.xlu0 %346
    %v353 = vunpack.c.l.b16 %v314
    %v354 = vunpack.c.l.b16 %v315
    %v355 = vunpack.c.l.b16 %v316
    %v356 = vunpack.c.l.b16 %v317
    %v357 = vpack.c.b16 %v354, %v353
    %v358 = vpack.c.b16 %v356, %v355
    %vm359 = vcmask 916480
    %v361 = vsel %vm359, %v357, 0
    %v364 = vsel %vm359, %v358, 0
    %366 = vmatprep.subr.bf16.mxu0 0
    %367 = vmatpush1.bf16.msra.mxu0 %v318
    %368 = vmatprep.subr.bf16.mxu0 0
    %369 = vmatpush1.bf16.msra.mxu0 %v319
    %370 = vmatprep.subr.bf16.mxu0 0
    %371 = vmatpush1.bf16.msra.mxu0 %v320
    %372 = vmatprep.subr.bf16.mxu0 0
    %373 = vmatpush1.bf16.msra.mxu0 %v321
    %374 = vmatprep.subr.bf16.mxu0 0
    %375 = vmatpush1.bf16.msra.mxu0 %v322
    %376 = vmatprep.subr.bf16.mxu0 0
    %377 = vmatpush1.bf16.msra.mxu0 %v323
    %378 = vmatprep.subr.bf16.mxu0 0
    %379 = vmatpush1.bf16.msra.mxu0 %v324
    %380 = vmatprep.subr.bf16.mxu0 0
    %381 = vmatpush1.bf16.msra.mxu0 0
    %382 = vmatprep.subr.bf16.mxu0 0
    %383 = vmatpush1.bf16.msra.mxu0 0
    %384 = vmatprep.subr.bf16.mxu0 0
    %385 = vmatpush1.bf16.msra.mxu0 0
    %386 = vmatprep.subr.bf16.mxu0 0
    %387 = vmatpush1.bf16.msra.mxu0 0
    %388 = vmatprep.subr.bf16.mxu0 0
    %389 = vmatpush1.bf16.msra.mxu0 0
    %390 = vmatprep.subr.bf16.mxu0 0
    %391 = vmatpush1.bf16.msra.mxu0 0
    %392 = vmatprep.subr.bf16.mxu0 0
    %393 = vmatpush1.bf16.msra.mxu0 0
    %394 = vmatprep.subr.bf16.mxu0 0
    %395 = vmatpush1.bf16.msra.mxu0 0
    %396 = vmatprep.subr.bf16.mxu0 0
    %397 = vmatpush1.bf16.msra.mxu0 0
    %398 = vmatprep.mubr.bf16.mxu0 0
    %399 = vmatmul.mubr.bf16.gmra.mrb[0].mxu0 %v361
    %v400 = vpop.f32.mrb[0].mxu0
    %v401 = vadd.f32 %v332, %v400
    %v402 = vpop.f32.mrb[0].mxu0
    %v403 = vpop.f32.mrb[0].mxu0
    %v404 = vadd.f32 %v337, %v403
    %v405 = vpop.f32.mrb[0].mxu0
    %406 = vmatprep.mubr.bf16.mxu0 0
    %407 = vmatmul.mubr.bf16.gmra.mrb[0].mxu0 %v364
    %v408 = vpop.f32.mrb[0].mxu0
    %v409 = vadd.f32 %v342, %v408
    %v410 = vpop.f32.mrb[0].mxu0
    %v411 = vpop.f32.mrb[0].mxu0
    %v412 = vadd.f32 %v347, %v411
    %v413 = vpop.f32.mrb[0].mxu0
    %414 = vdwg.mxu0
    %v415 = vmax.f32 %v401, 0.0
    %v416 = vmax.f32 %v404, 0.0
    %v417 = vmax.f32 %v409, 0.0
    %v418 = vmax.f32 %v412, 0.0
    %v419 = vpack.c.bf16 %v416, %v415
    %v420 = vpack.c.bf16 %v418, %v417
    %v421 = vld [vmem:[%s6] sm:$0xff]
    %v422 = vld [vmem:[%s6 + $0x8] sm:$0xff]
    %v423 = vld [vmem:[%s6 + $0x10] sm:$0xff]
    %v424 = vld [vmem:[%s6 + $0x18] sm:$0xff]
    %v425 = vld [vmem:[%s6 + $0x20] sm:$0xff]
    %v426 = vld [vmem:[%s6 + $0x28] sm:$0xff]
    %v427 = vld [vmem:[%s6 + $0x30] sm:$0x77]
    %v428 = vld [vmem:[%s6 + $0x38] sm:$0x77]
    %v429 = vld [vmem:[%s6 + $0x40] sm:$0x77]
    %v439 = vunpack.c.l.b16 %v421
    %v440 = vunpack.c.h.b16 %v421
    %v441 = vunpack.c.l.b16 %v422
    %v442 = vunpack.c.h.b16 %v422
    %v443 = vunpack.c.l.b16 %v423
    %v444 = vunpack.c.h.b16 %v423
    %v445 = vunpack.c.l.b16 %v424
    %v446 = vunpack.c.h.b16 %v424
    %v447 = vunpack.c.l.b16 %v425
    %v448 = vunpack.c.h.b16 %v425
    %v449 = vunpack.c.l.b16 %v426
    %v450 = vunpack.c.h.b16 %v426
    %v451 = vunpack.c.l.b16 %v427
    %v452 = vunpack.c.h.b16 %v427
    %v453 = vunpack.c.l.b16 %v428
    %v454 = vunpack.c.h.b16 %v428
    %v455 = vunpack.c.l.b16 %v429
    %v456 = vunpack.c.h.b16 %v429
    %v457 = vpack.c.b16 %v445, %v439
    %v458 = vpack.c.b16 %v446, %v440
    %v459 = vpack.c.b16 %v447, %v441
    %v460 = vpack.c.b16 %v448, %v442
    %v461 = vpack.c.b16 %v449, %v443
    %v462 = vpack.c.b16 %v450, %v444
    %v463 = vpack.c.b16 %v451, %v451
    %v464 = vpack.c.b16 %v452, %v452
    %v465 = vpack.c.b16 %v453, %v453
    %v466 = vpack.c.b16 %v454, %v454
    %v467 = vpack.c.b16 %v455, %v455
    %v468 = vpack.c.b16 %v456, %v456
    %vm475 = vcmask 171008
    %v477 = vsel %vm475, %v419, 0
    %v480 = vsel %vm475, %v420, 0
    %vm482 = vcmask 1041408
    %vm483 = vcmask 1042432
    %v484 = vsel %vm482, 4294967295, 65535
    %v485 = vsel %vm483, %v484, 0
    %v487 = vand.u32 %v463, %v485
    %v490 = vand.u32 %v464, %v485
    %v493 = vand.u32 %v465, %v485
    %v496 = vand.u32 %v466, %v485
    %v499 = vand.u32 %v467, %v485
    %v502 = vand.u32 %v468, %v485
    %504 = vmatprep.subr.bf16.mxu0 %v458
    %505 = vmatpush1.bf16.msra.mxu0 %v457
    %506 = vmatprep.subr.bf16.mxu0 %v490
    %507 = vmatpush1.bf16.msra.mxu0 %v487
    %508 = vmatprep.subr.bf16.mxu0 0
    %509 = vmatpush1.bf16.msra.mxu0 0
    %510 = vmatprep.subr.bf16.mxu0 0
    %511 = vmatpush1.bf16.msra.mxu0 0
    %512 = vmatprep.subr.bf16.mxu0 0
    %513 = vmatpush1.bf16.msra.mxu0 0
    %514 = vmatprep.subr.bf16.mxu0 0
    %515 = vmatpush1.bf16.msra.mxu0 0
    %516 = vmatprep.subr.bf16.mxu0 0
    %517 = vmatpush1.bf16.msra.mxu0 0
    %518 = vmatprep.subr.bf16.mxu0 0
    %519 = vmatpush1.bf16.msra.mxu0 0
    %520 = vmatprep.subr.bf16.mxu0 0
    %521 = vmatpush1.bf16.msra.mxu0 0
    %522 = vmatprep.subr.bf16.mxu0 0
    %523 = vmatpush1.bf16.msra.mxu0 0
    %524 = vmatprep.subr.bf16.mxu0 0
    %525 = vmatpush1.bf16.msra.mxu0 0
    %526 = vmatprep.subr.bf16.mxu0 0
    %527 = vmatpush1.bf16.msra.mxu0 0
    %528 = vmatprep.subr.bf16.mxu0 0
    %529 = vmatpush1.bf16.msra.mxu0 0
    %530 = vmatprep.subr.bf16.mxu0 0
    %531 = vmatpush1.bf16.msra.mxu0 0
    %532 = vmatprep.subr.bf16.mxu0 0
    %533 = vmatpush1.bf16.msra.mxu0 0
    %534 = vmatprep.subr.bf16.mxu0 0
    %535 = vmatpush1.bf16.msra.mxu0 0
    %536 = vmatprep.mubr.bf16.mxu0 0
    %537 = vmatmul.mubr.bf16.gmra.mrb[0].mxu0 %v477
    %v538 = vpop.f32.mrb[0].mxu0
    %v539 = vadd.f32 0.0, %v538
    %v540 = vpop.f32.mrb[0].mxu0
    %v541 = vadd.f32 0.0, %v540
    %v542 = vpop.f32.mrb[0].mxu0
    %v543 = vadd.f32 0.0, %v542
    %v544 = vpop.f32.mrb[0].mxu0
    %v545 = vadd.f32 0.0, %v544
    %546 = vmatprep.mubr.bf16.mxu0 0
    %547 = vmatmul.mubr.bf16.gmra.mrb[0].mxu0 %v480
    %v548 = vpop.f32.mrb[0].mxu0
    %v549 = vadd.f32 0.0, %v548
    %v550 = vpop.f32.mrb[0].mxu0
    %v551 = vadd.f32 0.0, %v550
    %v552 = vpop.f32.mrb[0].mxu0
    %v553 = vadd.f32 0.0, %v552
    %v554 = vpop.f32.mrb[0].mxu0
    %v555 = vadd.f32 0.0, %v554
    %556 = vdwg.mxu0
    %557 = vmatprep.subr.bf16.mxu0 %v460
    %558 = vmatpush1.bf16.msra.mxu0 %v459
    %559 = vmatprep.subr.bf16.mxu0 %v496
    %560 = vmatpush1.bf16.msra.mxu0 %v493
    %561 = vmatprep.subr.bf16.mxu0 0
    %562 = vmatpush1.bf16.msra.mxu0 0
    %563 = vmatprep.subr.bf16.mxu0 0
    %564 = vmatpush1.bf16.msra.mxu0 0
    %565 = vmatprep.subr.bf16.mxu0 0
    %566 = vmatpush1.bf16.msra.mxu0 0
    %567 = vmatprep.subr.bf16.mxu0 0
    %568 = vmatpush1.bf16.msra.mxu0 0
    %569 = vmatprep.subr.bf16.mxu0 0
    %570 = vmatpush1.bf16.msra.mxu0 0
    %571 = vmatprep.subr.bf16.mxu0 0
    %572 = vmatpush1.bf16.msra.mxu0 0
    %573 = vmatprep.subr.bf16.mxu0 0
    %574 = vmatpush1.bf16.msra.mxu0 0
    %575 = vmatprep.subr.bf16.mxu0 0
    %576 = vmatpush1.bf16.msra.mxu0 0
    %577 = vmatprep.subr.bf16.mxu0 0
    %578 = vmatpush1.bf16.msra.mxu0 0
    %579 = vmatprep.subr.bf16.mxu0 0
    %580 = vmatpush1.bf16.msra.mxu0 0
    %581 = vmatprep.subr.bf16.mxu0 0
    %582 = vmatpush1.bf16.msra.mxu0 0
    %583 = vmatprep.subr.bf16.mxu0 0
    %584 = vmatpush1.bf16.msra.mxu0 0
    %585 = vmatprep.subr.bf16.mxu0 0
    %586 = vmatpush1.bf16.msra.mxu0 0
    %587 = vmatprep.subr.bf16.mxu0 0
    %588 = vmatpush1.bf16.msra.mxu0 0
    %589 = vmatprep.mubr.bf16.mxu0 0
    %590 = vmatmul.mubr.bf16.gmra.mrb[0].mxu0 %v477
    %v591 = vpop.f32.mrb[0].mxu0
    %v592 = vadd.f32 0.0, %v591
    %v593 = vpop.f32.mrb[0].mxu0
    %v594 = vadd.f32 0.0, %v593
    %v595 = vpop.f32.mrb[0].mxu0
    %v596 = vadd.f32 0.0, %v595
    %v597 = vpop.f32.mrb[0].mxu0
    %v598 = vadd.f32 0.0, %v597
    %599 = vmatprep.mubr.bf16.mxu0 0
    %600 = vmatmul.mubr.bf16.gmra.mrb[0].mxu0 %v480
    %v601 = vpop.f32.mrb[0].mxu0
    %v602 = vadd.f32 0.0, %v601
    %v603 = vpop.f32.mrb[0].mxu0
    %v604 = vadd.f32 0.0, %v603
    %v605 = vpop.f32.mrb[0].mxu0
    %v606 = vadd.f32 0.0, %v605
    %v607 = vpop.f32.mrb[0].mxu0
    %v608 = vadd.f32 0.0, %v607
    %609 = vdwg.mxu0
    %610 = vmatprep.subr.bf16.mxu0 %v462
    %611 = vmatpush1.bf16.msra.mxu0 %v461
    %612 = vmatprep.subr.bf16.mxu0 %v502
    %613 = vmatpush1.bf16.msra.mxu0 %v499
    %614 = vmatprep.subr.bf16.mxu0 0
    %615 = vmatpush1.bf16.msra.mxu0 0
    %616 = vmatprep.subr.bf16.mxu0 0
    %617 = vmatpush1.bf16.msra.mxu0 0
    %618 = vmatprep.subr.bf16.mxu0 0
    %619 = vmatpush1.bf16.msra.mxu0 0
    %620 = vmatprep.subr.bf16.mxu0 0
    %621 = vmatpush1.bf16.msra.mxu0 0
    %622 = vmatprep.subr.bf16.mxu0 0
    %623 = vmatpush1.bf16.msra.mxu0 0
    %624 = vmatprep.subr.bf16.mxu0 0
    %625 = vmatpush1.bf16.msra.mxu0 0
    %626 = vmatprep.subr.bf16.mxu0 0
    %627 = vmatpush1.bf16.msra.mxu0 0
    %628 = vmatprep.subr.bf16.mxu0 0
    %629 = vmatpush1.bf16.msra.mxu0 0
    %630 = vmatprep.subr.bf16.mxu0 0
    %631 = vmatpush1.bf16.msra.mxu0 0
    %632 = vmatprep.subr.bf16.mxu0 0
    %633 = vmatpush1.bf16.msra.mxu0 0
    %634 = vmatprep.subr.bf16.mxu0 0
    %635 = vmatpush1.bf16.msra.mxu0 0
    %636 = vmatprep.subr.bf16.mxu0 0
    %637 = vmatpush1.bf16.msra.mxu0 0
    %638 = vmatprep.subr.bf16.mxu0 0
    %639 = vmatpush1.bf16.msra.mxu0 0
    %640 = vmatprep.subr.bf16.mxu0 0
    %641 = vmatpush1.bf16.msra.mxu0 0
    %642 = vmatprep.mubr.bf16.mxu0 0
    %643 = vmatmul.mubr.bf16.gmra.mrb[0].mxu0 %v477
    %v644 = vpop.f32.mrb[0].mxu0
    %v645 = vadd.f32 0.0, %v644
    %v646 = vpop.f32.mrb[0].mxu0
    %v647 = vadd.f32 0.0, %v646
    %v648 = vpop.f32.mrb[0].mxu0
    %v649 = vadd.f32 0.0, %v648
    %v650 = vpop.f32.mrb[0].mxu0
    %v651 = vadd.f32 0.0, %v650
    %652 = vmatprep.mubr.bf16.mxu0 0
    %653 = vmatmul.mubr.bf16.gmra.mrb[0].mxu0 %v480
    %v654 = vpop.f32.mrb[0].mxu0
    %v655 = vadd.f32 0.0, %v654
    %v656 = vpop.f32.mrb[0].mxu0
    %v657 = vadd.f32 0.0, %v656
    %v658 = vpop.f32.mrb[0].mxu0
    %v659 = vadd.f32 0.0, %v658
    %v660 = vpop.f32.mrb[0].mxu0
    %v661 = vadd.f32 0.0, %v660
    %662 = vdwg.mxu0
    %v663 = vld [vmem:[%s5] sm:$0xff]
    %v664 = vld [vmem:[%s5 + $0x8] sm:$0xff]
    %v665 = vld [vmem:[%s5 + $0x10] sm:$0xff]
    %v666 = vld [vmem:[%s5 + $0x18] sm:$0xff]
    %v667 = vld [vmem:[%s5 + $0x20] sm:$0xff]
    %v668 = vld [vmem:[%s5 + $0x28] sm:$0xff]
    %v669 = vld [vmem:[%s5 + $0x30] sm:$0xff]
    %v670 = vld [vmem:[%s5 + $0x38] sm:$0xff]
    %v671 = vld [vmem:[%s5 + $0x40] sm:$0xff]
    %v672 = vld [vmem:[%s5 + $0x48] sm:$0xff]
    %v673 = vld [vmem:[%s5 + $0x50] sm:$0xff]
    %v674 = vld [vmem:[%s5 + $0x58] sm:$0xff]
    %v675 = vunpack.c.l.bf16 %v663
    %v676 = vunpack.c.h.bf16 %v663
    %v677 = vunpack.c.l.bf16 %v664
    %v678 = vunpack.c.h.bf16 %v664
    %v679 = vunpack.c.l.bf16 %v665
    %v680 = vunpack.c.h.bf16 %v665
    %v681 = vunpack.c.l.bf16 %v666
    %v682 = vunpack.c.h.bf16 %v666
    %v683 = vunpack.c.l.bf16 %v667
    %v684 = vunpack.c.h.bf16 %v667
    %v685 = vunpack.c.l.bf16 %v668
    %v686 = vunpack.c.h.bf16 %v668
    %v687 = vunpack.c.l.bf16 %v669
    %v688 = vunpack.c.h.bf16 %v669
    %v689 = vunpack.c.l.bf16 %v670
    %v690 = vunpack.c.h.bf16 %v670
    %v691 = vunpack.c.l.bf16 %v671
    %v692 = vunpack.c.h.bf16 %v671
    %v693 = vunpack.c.l.bf16 %v672
    %v694 = vunpack.c.h.bf16 %v672
    %v695 = vunpack.c.l.bf16 %v673
    %v696 = vunpack.c.h.bf16 %v673
    %v697 = vunpack.c.l.bf16 %v674
    %v698 = vunpack.c.h.bf16 %v674
    %v699 = vmul.f32 %v539, %v675
    %v700 = vmul.f32 %v541, %v676
    %v701 = vmul.f32 %v592, %v677
    %v702 = vmul.f32 %v594, %v678
    %v703 = vmul.f32 %v645, %v679
    %v704 = vmul.f32 %v647, %v680
    %v705 = vmul.f32 %v543, %v681
    %v706 = vmul.f32 %v545, %v682
    %v707 = vmul.f32 %v596, %v683
    %v708 = vmul.f32 %v598, %v684
    %v709 = vmul.f32 %v649, %v685
    %v710 = vmul.f32 %v651, %v686
    %v711 = vmul.f32 %v549, %v687
    %v712 = vmul.f32 %v551, %v688
    %v713 = vmul.f32 %v602, %v689
    %v714 = vmul.f32 %v604, %v690
    %v715 = vmul.f32 %v655, %v691
    %v716 = vmul.f32 %v657, %v692
    %v717 = vmul.f32 %v553, %v693
    %v718 = vmul.f32 %v555, %v694
    %v719 = vmul.f32 %v606, %v695
    %v720 = vmul.f32 %v608, %v696
    %v721 = vmul.f32 %v659, %v697
    %v722 = vmul.f32 %v661, %v698
    %v723 = vadd.f32 %v699, %v705
    %v724 = vadd.f32 %v723, %v711
    %v725 = vadd.f32 %v724, %v717
    %v726 = vrot.slane %v725, 4
    %v727 = vadd.f32 %v725, %v726
    %v728 = vrot.slane %v727, 2
    %v729 = vadd.f32 %v727, %v728
    %v730 = vrot.slane %v729, 1
    %v731 = vadd.f32 %v729, %v730
    %v732 = vadd.f32 %v700, %v706
    %v733 = vadd.f32 %v732, %v712
    %v734 = vadd.f32 %v733, %v718
    %v735 = vrot.slane %v734, 4
    %v736 = vadd.f32 %v734, %v735
    %v737 = vrot.slane %v736, 2
    %v738 = vadd.f32 %v736, %v737
    %v739 = vrot.slane %v738, 1
    %v740 = vadd.f32 %v738, %v739
    %v741 = vadd.f32 %v701, %v707
    %v742 = vadd.f32 %v741, %v713
    %v743 = vadd.f32 %v742, %v719
    %v744 = vrot.slane %v743, 4
    %v745 = vadd.f32 %v743, %v744
    %v746 = vrot.slane %v745, 2
    %v747 = vadd.f32 %v745, %v746
    %v748 = vrot.slane %v747, 1
    %v749 = vadd.f32 %v747, %v748
    %v750 = vadd.f32 %v702, %v708
    %v751 = vadd.f32 %v750, %v714
    %v752 = vadd.f32 %v751, %v720
    %v753 = vrot.slane %v752, 4
    %v754 = vadd.f32 %v752, %v753
    %v755 = vrot.slane %v754, 2
    %v756 = vadd.f32 %v754, %v755
    %v757 = vrot.slane %v756, 1
    %v758 = vadd.f32 %v756, %v757
    %v759 = vadd.f32 %v703, %v709
    %v760 = vadd.f32 %v759, %v715
    %v761 = vadd.f32 %v760, %v721
    %v762 = vrot.slane %v761, 4
    %v763 = vadd.f32 %v761, %v762
    %v764 = vrot.slane %v763, 2
    %v765 = vadd.f32 %v763, %v764
    %v766 = vrot.slane %v765, 1
    %v767 = vadd.f32 %v765, %v766
    %vm768 = vcmask 261120
    %v769 = vsel %vm768, %v704, 0.0
    %v770 = vsel %vm768, %v710, 0.0
    %v771 = vadd.f32 %v769, %v770
    %v772 = vsel %vm768, %v716, 0.0
    %v773 = vadd.f32 %v771, %v772
    %v774 = vsel %vm768, %v722, 0.0
    %v775 = vadd.f32 %v773, %v774
    %v776 = vrot.slane %v775, 4
    %v777 = vadd.f32 %v775, %v776
    %v778 = vrot.slane %v777, 2
    %v779 = vadd.f32 %v777, %v778
    %v780 = vrot.slane %v779, 1
    %v781 = vadd.f32 %v779, %v780
    %v782 = vpack.c.bf16 %v731, %v731
    %v783 = vpack.c.bf16 %v740, %v740
    %v784 = vpack.c.bf16 %v749, %v749
    %v785 = vpack.c.bf16 %v758, %v758
    %v786 = vpack.c.bf16 %v767, %v767
    %v787 = vpack.c.bf16 %v781, %v781
    %v788 = vld [vmem:[%s7] sm:$0xf]
    %v789 = vld [vmem:[%s7 + $0x4] sm:$0xf]
    %v790 = vld [vmem:[%s7 + $0x8] sm:$0xf]
    %v791 = vld [vmem:[%s7 + $0xc] sm:$0xf]
    %v792 = vld [vmem:[%s7 + $0x10] sm:$0xf]
    %v793 = vld [vmem:[%s7 + $0x14] sm:$0xf]
    %v794 = vld [vmem:[%s7 + $0x18] sm:$0xf]
    %v795 = vld [vmem:[%s7 + $0x1c] sm:$0xf]
    %v796 = vld [vmem:[%s7 + $0x20] sm:$0xf]
    %v797 = vld [vmem:[%s7 + $0x24] sm:$0xf]
    %v798 = vld [vmem:[%s7 + $0x28] sm:$0xf]
    %v799 = vld [vmem:[%s7 + $0x2c] sm:$0xf]
    %v800 = vld [vmem:[%s7 + $0x30] sm:$0xf]
    %v801 = vld [vmem:[%s7 + $0x34] sm:$0xf]
    %v802 = vld [vmem:[%s7 + $0x38] sm:$0xf]
    %v803 = vld [vmem:[%s7 + $0x3c] sm:$0xf]
    %v804 = vld [vmem:[%s7 + $0x40] sm:$0xf]
    %v805 = vld [vmem:[%s7 + $0x44] sm:$0xf]
    %v806 = vld [vmem:[%s7 + $0x48] sm:$0xf]
    %v807 = vld [vmem:[%s7 + $0x4c] sm:$0xf]
    %v808 = vld [vmem:[%s7 + $0x50] sm:$0xf]
    %v809 = vld [vmem:[%s7 + $0x54] sm:$0xf]
    %v810 = vld [vmem:[%s7 + $0x58] sm:$0xf]
    %v811 = vld [vmem:[%s7 + $0x5c] sm:$0xf]
    %v812 = vld [vmem:[%s7 + $0x60] sm:$0xf]
    %v813 = vld [vmem:[%s7 + $0x64] sm:$0xf]
    %v814 = vld [vmem:[%s7 + $0x68] sm:$0xf]
    %v815 = vld [vmem:[%s7 + $0x6c] sm:$0xf]
    %v816 = vld [vmem:[%s7 + $0x70] sm:$0xf]
    %v817 = vld [vmem:[%s7 + $0x74] sm:$0xf]
    %v818 = vld [vmem:[%s7 + $0x78] sm:$0xf]
    %v819 = vld [vmem:[%s7 + $0x7c] sm:$0xf]
    %v820 = vld [vmem:[%s7 + $0x80] sm:$0xf]
    %v821 = vld [vmem:[%s7 + $0x84] sm:$0xf]
    %v822 = vld [vmem:[%s7 + $0x88] sm:$0xf]
    %v823 = vld [vmem:[%s7 + $0x8c] sm:$0xf]
    %v824 = vld [vmem:[%s7 + $0x90] sm:$0xf]
    %v825 = vld [vmem:[%s7 + $0x94] sm:$0xf]
    %v826 = vld [vmem:[%s7 + $0x98] sm:$0xf]
    %v827 = vld [vmem:[%s7 + $0x9c] sm:$0xf]
    %v828 = vld [vmem:[%s7 + $0xa0] sm:$0xf]
    %v829 = vld [vmem:[%s7 + $0xa4] sm:$0xf]
    %v830 = vld [vmem:[%s7 + $0xa8] sm:$0xf]
    %v831 = vld [vmem:[%s7 + $0xac] sm:$0xf]
    %v832 = vld [vmem:[%s7 + $0xb0] sm:$0xf]
    %v833 = vld [vmem:[%s7 + $0xb4] sm:$0xf]
    %v834 = vld [vmem:[%s7 + $0xb8] sm:$0xf]
    %v835 = vld [vmem:[%s7 + $0xbc] sm:$0xf]
    %v836 = vld [vmem:[%s7 + $0xc0] sm:$0xf]
    %v837 = vld [vmem:[%s7 + $0xc4] sm:$0xf]
    %v838 = vld [vmem:[%s7 + $0xc8] sm:$0xf]
    %v839 = vld [vmem:[%s7 + $0xcc] sm:$0xf]
    %v840 = vld [vmem:[%s7 + $0xd0] sm:$0xf]
    %v841 = vld [vmem:[%s7 + $0xd4] sm:$0xf]
    %v842 = vld [vmem:[%s7 + $0xd8] sm:$0xf]
    %v843 = vld [vmem:[%s7 + $0xdc] sm:$0xf]
    %v844 = vld [vmem:[%s7 + $0xe0] sm:$0xf]
    %v845 = vld [vmem:[%s7 + $0xe4] sm:$0xf]
    %v846 = vld [vmem:[%s7 + $0xe8] sm:$0xf]
    %v847 = vld [vmem:[%s7 + $0xec] sm:$0xf]
    %v848 = vld [vmem:[%s7 + $0xf0] sm:$0xf]
    %v849 = vld [vmem:[%s7 + $0xf4] sm:$0xf]
    %v850 = vld [vmem:[%s7 + $0xf8] sm:$0xf]
    %v851 = vld [vmem:[%s7 + $0xfc] sm:$0xf]
    %v852 = vld [vmem:[%s7 + $0x100] sm:$0xf]
    %v853 = vld [vmem:[%s7 + $0x104] sm:$0xf]
    %v854 = vld [vmem:[%s7 + $0x108] sm:$0xf]
    %v855 = vld [vmem:[%s7 + $0x10c] sm:$0xf]
    %v856 = vld [vmem:[%s7 + $0x110] sm:$0xf]
    %v857 = vld [vmem:[%s7 + $0x114] sm:$0xf]
    %v858 = vld [vmem:[%s7 + $0x118] sm:$0xf]
    %v859 = vld [vmem:[%s7 + $0x11c] sm:$0xf]
    %v860 = vld [vmem:[%s7 + $0x120] sm:$0xf]
    %v861 = vld [vmem:[%s7 + $0x124] sm:$0xf]
    %v862 = vld [vmem:[%s7 + $0x128] sm:$0xf]
    %v863 = vld [vmem:[%s7 + $0x12c] sm:$0xf]
    %v864 = vld [vmem:[%s7 + $0x130] sm:$0xf]
    %v865 = vld [vmem:[%s7 + $0x134] sm:$0xf]
    %v866 = vld [vmem:[%s7 + $0x138] sm:$0xf]
    %v867 = vld [vmem:[%s7 + $0x13c] sm:$0xf]
    %v868 = vld [vmem:[%s7 + $0x140] sm:$0xf]
    %v869 = vld [vmem:[%s7 + $0x144] sm:$0xf]
    %v870 = vld [vmem:[%s7 + $0x148] sm:$0xf]
    %v871 = vld [vmem:[%s7 + $0x14c] sm:$0xf]
    %v872 = vld [vmem:[%s8] sm:$0x1]
    %v957 = vunpack.c.l.b16 %v788
    %v958 = vunpack.c.l.b16 %v789
    %v959 = vunpack.c.l.b16 %v790
    %v960 = vunpack.c.l.b16 %v791
    %v961 = vunpack.c.l.b16 %v792
    %v962 = vunpack.c.l.b16 %v793
    %v963 = vunpack.c.l.b16 %v794
    %v964 = vunpack.c.l.b16 %v795
    %v965 = vunpack.c.l.b16 %v796
    %v966 = vunpack.c.l.b16 %v797
    %v967 = vunpack.c.l.b16 %v798
    %v968 = vunpack.c.l.b16 %v799
    %v969 = vunpack.c.l.b16 %v800
    %v970 = vunpack.c.l.b16 %v801
    %v971 = vunpack.c.l.b16 %v802
    %v972 = vunpack.c.l.b16 %v803
    %v973 = vunpack.c.l.b16 %v804
    %v974 = vunpack.c.l.b16 %v805
    %v975 = vunpack.c.l.b16 %v806
    %v976 = vunpack.c.l.b16 %v807
    %v977 = vunpack.c.l.b16 %v808
    %v978 = vunpack.c.l.b16 %v809
    %v979 = vunpack.c.l.b16 %v810
    %v980 = vunpack.c.l.b16 %v811
    %v981 = vunpack.c.l.b16 %v812
    %v982 = vunpack.c.l.b16 %v813
    %v983 = vunpack.c.l.b16 %v814
    %v984 = vunpack.c.l.b16 %v815
    %v985 = vunpack.c.l.b16 %v816
    %v986 = vunpack.c.l.b16 %v817
    %v987 = vunpack.c.l.b16 %v818
    %v988 = vunpack.c.l.b16 %v819
    %v989 = vunpack.c.l.b16 %v820
    %v990 = vunpack.c.l.b16 %v821
    %v991 = vunpack.c.l.b16 %v822
    %v992 = vunpack.c.l.b16 %v823
    %v993 = vunpack.c.l.b16 %v824
    %v994 = vunpack.c.l.b16 %v825
    %v995 = vunpack.c.l.b16 %v826
    %v996 = vunpack.c.l.b16 %v827
    %v997 = vunpack.c.l.b16 %v828
    %v998 = vunpack.c.l.b16 %v829
    %v999 = vunpack.c.l.b16 %v830
    %v1000 = vunpack.c.l.b16 %v831
    %v1001 = vunpack.c.l.b16 %v832
    %v1002 = vunpack.c.l.b16 %v833
    %v1003 = vunpack.c.l.b16 %v834
    %v1004 = vunpack.c.l.b16 %v835
    %v1005 = vunpack.c.l.b16 %v836
    %v1006 = vunpack.c.l.b16 %v837
    %v1007 = vunpack.c.l.b16 %v838
    %v1008 = vunpack.c.l.b16 %v839
    %v1009 = vunpack.c.l.b16 %v840
    %v1010 = vunpack.c.l.b16 %v841
    %v1011 = vunpack.c.l.b16 %v842
    %v1012 = vunpack.c.l.b16 %v843
    %v1013 = vunpack.c.l.b16 %v844
    %v1014 = vunpack.c.l.b16 %v845
    %v1015 = vunpack.c.l.b16 %v846
    %v1016 = vunpack.c.l.b16 %v847
    %v1017 = vunpack.c.l.b16 %v848
    %v1018 = vunpack.c.l.b16 %v849
    %v1019 = vunpack.c.l.b16 %v850
    %v1020 = vunpack.c.l.b16 %v851
    %v1021 = vunpack.c.l.b16 %v852
    %v1022 = vunpack.c.l.b16 %v853
    %v1023 = vunpack.c.l.b16 %v854
    %v1024 = vunpack.c.l.b16 %v855
    %v1025 = vunpack.c.l.b16 %v856
    %v1026 = vunpack.c.l.b16 %v857
    %v1027 = vunpack.c.l.b16 %v858
    %v1028 = vunpack.c.l.b16 %v859
    %v1029 = vunpack.c.l.b16 %v860
    %v1030 = vunpack.c.l.b16 %v861
    %v1031 = vunpack.c.l.b16 %v862
    %v1032 = vunpack.c.l.b16 %v863
    %v1033 = vunpack.c.l.b16 %v864
    %v1034 = vunpack.c.l.b16 %v865
    %v1035 = vunpack.c.l.b16 %v866
    %v1036 = vunpack.c.l.b16 %v867
    %v1037 = vunpack.c.l.b16 %v868
    %v1038 = vunpack.c.l.b16 %v869
    %v1039 = vunpack.c.l.b16 %v870
    %v1040 = vunpack.c.l.b16 %v871
    %v1041 = vpack.c.b16 %v958, %v957
    %v1042 = vpack.c.b16 %v960, %v959
    %v1043 = vpack.c.b16 %v962, %v961
    %v1044 = vpack.c.b16 %v964, %v963
    %v1045 = vpack.c.b16 %v966, %v965
    %v1046 = vpack.c.b16 %v968, %v967
    %v1047 = vpack.c.b16 %v970, %v969
    %v1048 = vpack.c.b16 %v972, %v971
    %v1049 = vpack.c.b16 %v974, %v973
    %v1050 = vpack.c.b16 %v976, %v975
    %v1051 = vpack.c.b16 %v978, %v977
    %v1052 = vpack.c.b16 %v980, %v979
    %v1053 = vpack.c.b16 %v982, %v981
    %v1054 = vpack.c.b16 %v984, %v983
    %v1055 = vpack.c.b16 %v986, %v985
    %v1056 = vpack.c.b16 %v988, %v987
    %v1057 = vpack.c.b16 %v990, %v989
    %v1058 = vpack.c.b16 %v992, %v991
    %v1059 = vpack.c.b16 %v994, %v993
    %v1060 = vpack.c.b16 %v996, %v995
    %v1061 = vpack.c.b16 %v998, %v997
    %v1062 = vpack.c.b16 %v1000, %v999
    %v1063 = vpack.c.b16 %v1002, %v1001
    %v1064 = vpack.c.b16 %v1004, %v1003
    %v1065 = vpack.c.b16 %v1006, %v1005
    %v1066 = vpack.c.b16 %v1008, %v1007
    %v1067 = vpack.c.b16 %v1010, %v1009
    %v1068 = vpack.c.b16 %v1012, %v1011
    %v1069 = vpack.c.b16 %v1014, %v1013
    %v1070 = vpack.c.b16 %v1016, %v1015
    %v1071 = vpack.c.b16 %v1018, %v1017
    %v1072 = vpack.c.b16 %v1020, %v1019
    %v1073 = vpack.c.b16 %v1022, %v1021
    %v1074 = vpack.c.b16 %v1024, %v1023
    %v1075 = vpack.c.b16 %v1026, %v1025
    %v1076 = vpack.c.b16 %v1028, %v1027
    %v1077 = vpack.c.b16 %v1030, %v1029
    %v1078 = vpack.c.b16 %v1032, %v1031
    %v1079 = vpack.c.b16 %v1034, %v1033
    %v1080 = vpack.c.b16 %v1036, %v1035
    %v1081 = vpack.c.b16 %v1038, %v1037
    %v1082 = vpack.c.b16 %v1040, %v1039
    %v1126 = vsel %vm768, %v787, 0
    %1128 = vmatprep.subr.bf16.mxu0 0
    %1129 = vmatpush1.bf16.msra.mxu0 %v1041
    %1130 = vmatprep.subr.bf16.mxu0 0
    %1131 = vmatpush1.bf16.msra.mxu0 %v1042
    %1132 = vmatprep.subr.bf16.mxu0 0
    %1133 = vmatpush1.bf16.msra.mxu0 %v1043
    %1134 = vmatprep.subr.bf16.mxu0 0
    %1135 = vmatpush1.bf16.msra.mxu0 %v1044
    %1136 = vmatprep.subr.bf16.mxu0 0
    %1137 = vmatpush1.bf16.msra.mxu0 %v1045
    %1138 = vmatprep.subr.bf16.mxu0 0
    %1139 = vmatpush1.bf16.msra.mxu0 %v1046
    %1140 = vmatprep.subr.bf16.mxu0 0
    %1141 = vmatpush1.bf16.msra.mxu0 %v1047
    %1142 = vmatprep.subr.bf16.mxu0 0
    %1143 = vmatpush1.bf16.msra.mxu0 %v1048
    %1144 = vmatprep.subr.bf16.mxu0 0
    %1145 = vmatpush1.bf16.msra.mxu0 %v1049
    %1146 = vmatprep.subr.bf16.mxu0 0
    %1147 = vmatpush1.bf16.msra.mxu0 %v1050
    %1148 = vmatprep.subr.bf16.mxu0 0
    %1149 = vmatpush1.bf16.msra.mxu0 %v1051
    %1150 = vmatprep.subr.bf16.mxu0 0
    %1151 = vmatpush1.bf16.msra.mxu0 %v1052
    %1152 = vmatprep.subr.bf16.mxu0 0
    %1153 = vmatpush1.bf16.msra.mxu0 %v1053
    %1154 = vmatprep.subr.bf16.mxu0 0
    %1155 = vmatpush1.bf16.msra.mxu0 %v1054
    %1156 = vmatprep.subr.bf16.mxu0 0
    %1157 = vmatpush1.bf16.msra.mxu0 %v1055
    %1158 = vmatprep.subr.bf16.mxu0 0
    %1159 = vmatpush1.bf16.msra.mxu0 %v1056
    %1160 = vmatprep.mubr.bf16.mxu0 %v783
    %1161 = vmatmul.mubr.bf16.gmra.mrb[0].mxu0 %v782
    %v1162 = vpop.f32.mrb[0].mxu0
    %v1163 = vadd.f32 %v872, %v1162
    %v1164 = vpop.f32.mrb[0].mxu0
    %v1165 = vpop.f32.mrb[0].mxu0
    %v1166 = vpop.f32.mrb[0].mxu0
    %1167 = vdwg.mxu0
    %1168 = vmatprep.subr.bf16.mxu0 0
    %1169 = vmatpush1.bf16.msra.mxu0 %v1057
    %1170 = vmatprep.subr.bf16.mxu0 0
    %1171 = vmatpush1.bf16.msra.mxu0 %v1058
    %1172 = vmatprep.subr.bf16.mxu0 0
    %1173 = vmatpush1.bf16.msra.mxu0 %v1059
    %1174 = vmatprep.subr.bf16.mxu0 0
    %1175 = vmatpush1.bf16.msra.mxu0 %v1060
    %1176 = vmatprep.subr.bf16.mxu0 0
    %1177 = vmatpush1.bf16.msra.mxu0 %v1061
    %1178 = vmatprep.subr.bf16.mxu0 0
    %1179 = vmatpush1.bf16.msra.mxu0 %v1062
    %1180 = vmatprep.subr.bf16.mxu0 0
    %1181 = vmatpush1.bf16.msra.mxu0 %v1063
    %1182 = vmatprep.subr.bf16.mxu0 0
    %1183 = vmatpush1.bf16.msra.mxu0 %v1064
    %1184 = vmatprep.subr.bf16.mxu0 0
    %1185 = vmatpush1.bf16.msra.mxu0 %v1065
    %1186 = vmatprep.subr.bf16.mxu0 0
    %1187 = vmatpush1.bf16.msra.mxu0 %v1066
    %1188 = vmatprep.subr.bf16.mxu0 0
    %1189 = vmatpush1.bf16.msra.mxu0 %v1067
    %1190 = vmatprep.subr.bf16.mxu0 0
    %1191 = vmatpush1.bf16.msra.mxu0 %v1068
    %1192 = vmatprep.subr.bf16.mxu0 0
    %1193 = vmatpush1.bf16.msra.mxu0 %v1069
    %1194 = vmatprep.subr.bf16.mxu0 0
    %1195 = vmatpush1.bf16.msra.mxu0 %v1070
    %1196 = vmatprep.subr.bf16.mxu0 0
    %1197 = vmatpush1.bf16.msra.mxu0 %v1071
    %1198 = vmatprep.subr.bf16.mxu0 0
    %1199 = vmatpush1.bf16.msra.mxu0 %v1072
    %1200 = vmatprep.mubr.bf16.mxu0 %v785
    %1201 = vmatmul.mubr.bf16.gmra.mrb[0].mxu0 %v784
    %v1202 = vpop.f32.mrb[0].mxu0
    %v1203 = vadd.f32 %v1163, %v1202
    %v1204 = vpop.f32.mrb[0].mxu0
    %v1205 = vpop.f32.mrb[0].mxu0
    %v1206 = vpop.f32.mrb[0].mxu0
    %1207 = vdwg.mxu0
    %1208 = vmatprep.subr.bf16.mxu0 0
    %1209 = vmatpush1.bf16.msra.mxu0 %v1073
    %1210 = vmatprep.subr.bf16.mxu0 0
    %1211 = vmatpush1.bf16.msra.mxu0 %v1074
    %1212 = vmatprep.subr.bf16.mxu0 0
    %1213 = vmatpush1.bf16.msra.mxu0 %v1075
    %1214 = vmatprep.subr.bf16.mxu0 0
    %1215 = vmatpush1.bf16.msra.mxu0 %v1076
    %1216 = vmatprep.subr.bf16.mxu0 0
    %1217 = vmatpush1.bf16.msra.mxu0 %v1077
    %1218 = vmatprep.subr.bf16.mxu0 0
    %1219 = vmatpush1.bf16.msra.mxu0 %v1078
    %1220 = vmatprep.subr.bf16.mxu0 0
    %1221 = vmatpush1.bf16.msra.mxu0 %v1079
    %1222 = vmatprep.subr.bf16.mxu0 0
    %1223 = vmatpush1.bf16.msra.mxu0 %v1080
    %1224 = vmatprep.subr.bf16.mxu0 0
    %1225 = vmatpush1.bf16.msra.mxu0 %v1081
    %1226 = vmatprep.subr.bf16.mxu0 0
    %1227 = vmatpush1.bf16.msra.mxu0 %v1082
    %1228 = vmatprep.subr.bf16.mxu0 0
    %1229 = vmatpush1.bf16.msra.mxu0 0
    %1230 = vmatprep.subr.bf16.mxu0 0
    %1231 = vmatpush1.bf16.msra.mxu0 0
    %1232 = vmatprep.subr.bf16.mxu0 0
    %1233 = vmatpush1.bf16.msra.mxu0 0
    %1234 = vmatprep.subr.bf16.mxu0 0
    %1235 = vmatpush1.bf16.msra.mxu0 0
    %1236 = vmatprep.subr.bf16.mxu0 0
    %1237 = vmatpush1.bf16.msra.mxu0 0
    %1238 = vmatprep.subr.bf16.mxu0 0
    %1239 = vmatpush1.bf16.msra.mxu0 0
    %1240 = vmatprep.mubr.bf16.mxu0 %v1126
    %1241 = vmatmul.mubr.bf16.gmra.mrb[0].mxu0 %v786
    %v1242 = vpop.f32.mrb[0].mxu0
    %v1243 = vadd.f32 %v1203, %v1242
    %v1244 = vpop.f32.mrb[0].mxu0
    %v1245 = vpop.f32.mrb[0].mxu0
    %v1246 = vpop.f32.mrb[0].mxu0
    %1247 = vdwg.mxu0
    %vm1248 = vcmask 253952
    %1249 = vst.msk [vmem:[#allocation2] sm:$0x1] %vm1248, %v1243
    // Predicated region
    $region38: #{encoder_forward.1} parent=1 // pred_check
      _
    $region39: #{encoder_forward.1} parent=1 // pred_check_branch
      %1251 = sbr.rel (0) target = $region41
    $region40: #{encoder_forward.1} parent=1 // pred_region
      %s1253 = ssub.s32 16, 16
      %1254 = vsyncadd [#allocation3], %s1253
      %s1256 = sshll.u32 [#allocation2], 4
      %s1257 = int_to_ptr.vmem [resolvable:$true] %s1256
      %1259 = dma.vmem_to_hbm [thread:$0]  %s1257, 16, %s9, [#allocation3]
    $region41: #{encoder_forward.1} parent=1 // pred_fallthru
      _
    // Predicated region
    $region42: #{encoder_forward.1} parent=1 // pred_check
      _
    $region43: #{encoder_forward.1} parent=1 // pred_check_branch
      %1261 = sbr.rel (0) target = $region45
    $region44: #{encoder_forward.1} parent=1 // pred_region
      %1262 = dma.done [#allocation3], 16
    $region45: #{encoder_forward.1} parent=1 // pred_fallthru
      _
    %1263 = vsyncpa [#allocation3], 1

</llo_original>
